<compile_context>
chip_gen: v5e
topology: v5e:2x2
jax: 0.10.0
libtpu: 0.0.40
codegen_flags: <defaults>
</compile_context>

<pallas_src>
import functools

import jax
import jax.numpy as jnp
import numpy as np
from jax import lax
from jax.experimental import pallas as pl
from jax.experimental.pallas import tpu as pltpu


def _round_up(x, m):
    return ((x + m - 1) // m) * m


def _chip_traits():
    """Best-effort TPU generation detection with safe fallbacks."""
    kind = ""
    try:
        kind = jax.devices()[0].device_kind.lower()
    except Exception:
        pass
    # Chips whose TensorCores share one Pallas grid (megacore split via
    # dimension_semantics): v4 / v5p / v7x.
    num_tc = 2 if any(t in kind for t in ("v4", "v5p", "v5 p", "v7")) else 1
    # bf16 VALUs exist on v6e/v7x; v5e (and older) emulate bf16 elementwise.
    has_bf16_vpu = any(t in kind for t in ("v6", "v7"))
    # 2x256x256 MXU on v6e/v7x; 128-wide on v5e and older.
    mxu_width = 256 if any(t in kind for t in ("v6", "v7")) else 128
    try:
        phys_vmem = int(pltpu.get_tpu_info().vmem_capacity_bytes)
    except Exception:
        phys_vmem = (64 << 20) if "v7" in kind else (128 << 20)
    return dict(kind=kind, num_tc=num_tc, has_bf16_vpu=has_bf16_vpu,
                mxu_width=mxu_width, phys_vmem=phys_vmem)


def _choose_tile_m(M, desired, num_tensorcores):
    """Row tile: multiple of 8, as big as requested/needed.
    On 1-TC chips (v5e/v6e) biggest-tile-that-covers-M wins (fewer grid steps
    = less per-step overhead).  On multi-TC chips (v7x) clamp so there are
    >= 2 grid steps per TensorCore, keeping each core's prefetch/writeback
    software pipeline busy."""
    t = _round_up(min(desired, max(M, 1)), 8)
    if num_tensorcores > 1 and M > 8:
        per_step = _round_up(-(-M // (2 * num_tensorcores)), 8)
        t = min(t, per_step)
    return max(8, t)


def _matmul_vmem_bytes(tm, L, V_pad, D_pad, table_bytes, vpu_bytes, cd_bytes,
                       pooling_strat):
    """Per-step VMEM footprint including in-kernel intermediates."""
    # table single-buffered; token/output blocks double-buffered by the pipeline
    io = table_bytes + 2 * (tm * L * 4) + 2 * (tm * D_pad * 4)
    if pooling_strat == "mean":
        # iota (i32) + counts/compare temps (vpu dtype) + matmul LHS (compute
        # dtype) + f32 result + seq_lens.
        inter = tm * V_pad * (4 + 2 * vpu_bytes + cd_bytes) + tm * (D_pad + 1) * 4
    else:
        # iota (i32) + per-step one-hot (vpu + compute dtype) + f32 matmul
        # result + f32 running max.
        inter = tm * V_pad * (4 + vpu_bytes + cd_bytes) + 2 * tm * D_pad * 4
    return io + inter


# --------------------------- small-vocabulary kernels ------------------------


def _mean_pool_kernel(tok_ref, emb_ref, out_ref, *, padding_token, vpu_dtype):
    """sum_L embed(x) / count(x != PAD) -- matches torch.sum(...).div_(seq_lens)."""
    tok = tok_ref[...]                                         # (TM, L) int32
    tm, L = tok.shape
    V = emb_ref.shape[0]

    # Per-row token counts built incrementally against a (TM, V) iota so the
    # largest live intermediate is (TM, V), not (TM, L, V).  Counts <= L are
    # exact in bf16, so vpu_dtype is bf16 on chips with bf16 VALUs (v6e/v7x).
    vocab_iota = lax.broadcasted_iota(jnp.int32, (tm, V), 1)   # hoisted, built once
    counts = jnp.zeros((tm, V), dtype=vpu_dtype)
    for l in range(L):                                         # L is small & static
        counts = counts + (tok[:, l:l + 1] == vocab_iota).astype(vpu_dtype)

    # Sum of embeddings over the sequence == counts @ E: one MXU matmul with
    # f32 accumulation.  PAD row of the table is zero, so PAD tokens add 0.
    summed = jnp.dot(counts.astype(emb_ref.dtype), emb_ref[...],
                     preferred_element_type=jnp.float32)       # (TM, D) f32

    seq_lens = jnp.sum((tok != padding_token).astype(jnp.float32),
                       axis=-1, keepdims=True)                 # (TM, 1)
    seq_lens = jnp.maximum(seq_lens, 1.0)   # padded all-PAD rows: avoid 0-div NaN
    out_ref[...] = summed * (1.0 / seq_lens)  # narrow exact reciprocal, broadcast


def _max_pool_kernel(tok_ref, emb_ref, out_ref, *, vpu_dtype):
    """max_L embed(x) -- matches torch.max(text_embedding, dim=2)[0]."""
    tok = tok_ref[...]                                         # (TM, L) int32
    tm, L = tok.shape
    V, D = emb_ref.shape
    emb = emb_ref[...]

    # L small matmuls folded with a running maximum: peak f32 intermediate is
    # (TM, D), not (TM*L, D), and no (TM, L, V) one-hot is ever materialized.
    vocab_iota = lax.broadcasted_iota(jnp.int32, (tm, V), 1)
    result = None
    for l in range(L):
        onehot = (tok[:, l:l + 1] == vocab_iota).astype(vpu_dtype)   # (TM, V)
        e = jnp.dot(onehot.astype(emb.dtype), emb,
                    preferred_element_type=jnp.float32)              # (TM, D) f32
        result = e if result is None else jnp.maximum(result, e)
    # NOTE: PAD's zero row participates in the max, exactly as in the torch code.
    out_ref[...] = result


# --------------------------- large-vocabulary kernel -------------------------


def _gather_pool_kernel(tok_flat_ref, tok_ref, table_ref, out_ref,
                        rowbuf, sem, *, tm, L, pooling_strat, padding_token):
    """Large-V path: table stays in HBM; each token's (1, D_pad) row is gathered
    with a double-buffered DMA and folded into the pooled row on the fly."""
    base = pl.program_id(0) * (tm * L)
    n_tok = tm * L

    def start(t, slot):
        token = tok_flat_ref[base + t]          # scalar read from SMEM prefetch
        pltpu.make_async_copy(table_ref.at[pl.ds(token, 1), :],
                              rowbuf.at[slot], sem.at[slot]).start()

    start(0, 0)
    rows, cur = [], None
    for t in range(n_tok):                      # fully static (tm, L small)
        slot = t % 2
        pltpu.make_async_copy(table_ref.at[pl.ds(0, 1), :],   # shape-only for wait
                              rowbuf.at[slot], sem.at[slot]).wait()
        if t + 1 < n_tok:
            start(t + 1, 1 - slot)              # prefetch next row into other slot
        row = rowbuf[slot].astype(jnp.float32)                 # (1, D_pad)
        l = t % L
        if l == 0:
            cur = row
        elif pooling_strat == "mean":
            cur = cur + row                     # PAD row is zero -> adds nothing
        else:
            cur = jnp.maximum(cur, row)         # PAD row participates, as in torch
        if l == L - 1:
            rows.append(cur)
    pooled = jnp.concatenate(rows, axis=0)                     # (tm, D_pad) f32

    if pooling_strat == "mean":
        tok = tok_ref[...]
        seq_lens = jnp.sum((tok != padding_token).astype(jnp.float32),
                           axis=-1, keepdims=True)
        pooled = pooled * (1.0 / jnp.maximum(seq_lens, 1.0))
    out_ref[...] = pooled


# --------------------------------- wrapper -----------------------------------


def word_embedding_forward(x, emb_table, *, pooling_strat, padding_token,
                           tile_m=256, compute_dtype=jnp.bfloat16,
                           use_gather=None):
    """x: (b, N*K, L) integer tokens; emb_table: (V, D) float32.
    Returns (b, N*K, D) float32 (matches the torch module's forward)."""
    if pooling_strat not in ("mean", "max"):
        raise NameError(f"{pooling_strat} pooling strat not defined")

    b, nk, L = x.shape
    V, D = emb_table.shape
    M = b * nk

    traits = _chip_traits()
    vmem_cap = (traits["phys_vmem"] * 3) // 4   # ~48 MiB on v7x, ~96 MiB v5e/v6e
    cd_bytes = jnp.dtype(compute_dtype).itemsize
    vpu_dtype = (compute_dtype
                 if (traits["has_bf16_vpu"] and compute_dtype == jnp.bfloat16)
                 else jnp.float32)
    vpu_bytes = jnp.dtype(vpu_dtype).itemsize

    # Contraction dim padded to the MXU width (256 on v6e/v7x once V >= 256);
    # D padded to 128 only: lane-dense stores without inflating the dominant
    # f32 output writeback stream.
    v_align = traits["mxu_width"] if V >= traits["mxu_width"] else 128
    V_pad = _round_up(V, v_align)
    D_pad = _round_up(D, 128)
    table_bytes = V_pad * D_pad * cd_bytes

    if use_gather is None:
        # one-hot@table needs the padded table resident in VMEM and costs
        # ~2*M*V*D MXU flops: switch to the HBM row-gather for real vocabularies.
        use_gather = (table_bytes > min(8 << 20, vmem_cap // 4)) or V_pad > 4096

    tok = x.reshape(M, L).astype(jnp.int32)

    if use_gather:
        # ------------- large-V path: DMA row gather from an HBM table -------------
        tm = 8                              # rows per grid step; tm*L row DMAs/step
        M_pad = _round_up(M, tm)
        if M_pad != M:
            tok = jnp.pad(tok, ((0, M_pad - M), (0, 0)),
                          constant_values=padding_token)
        table = emb_table.astype(compute_dtype)
        if D_pad != D:
            table = jnp.pad(table, ((0, 0), (0, D_pad - D)))

        kernel = functools.partial(
            _gather_pool_kernel, tm=tm, L=L,
            pooling_strat=pooling_strat, padding_token=padding_token)
        vmem_needed = (2 * (tm * L * 4 + tm * D_pad * 4)   # token/output blocks
                       + 2 * D_pad * cd_bytes              # row double buffer
                       + 2 * tm * D_pad * 4)               # pooled rows (f32)
        vmem_limit = int(min(max(4 * vmem_needed, 32 << 20), vmem_cap))
        cost = pl.CostEstimate(
            flops=2 * M_pad * L * D_pad, transcendentals=0,
            bytes_accessed=M_pad * L * (8 + D_pad * cd_bytes) + M_pad * D_pad * 4)

        out = pl.pallas_call(
            kernel,
            out_shape=jax.ShapeDtypeStruct((M_pad, D_pad), jnp.float32),
            grid_spec=pltpu.PrefetchScalarGridSpec(
                num_scalar_prefetch=1,                    # flat token ids -> SMEM
                grid=(M_pad // tm,),
                in_specs=[
                    pl.BlockSpec((tm, L), lambda i, tf: (i, 0)),   # tokens (VMEM)
                    pl.BlockSpec(memory_space=pl.ANY),             # table in HBM
                ],
                out_specs=pl.BlockSpec((tm, D_pad), lambda i, tf: (i, 0)),
                scratch_shapes=[
                    pltpu.VMEM((2, 1, D_pad), compute_dtype),      # row dbl-buffer
                    pltpu.SemaphoreType.DMA((2,)),
                ]),
            compiler_params=pltpu.CompilerParams(
                dimension_semantics=("parallel",),
                vmem_limit_bytes=vmem_limit),
            cost_estimate=cost,
        )(tok.reshape(-1), tok, table)
        return out[:M, :D].reshape(b, nk, D)

    # ------------- small-V path: one-hot @ table on the MXU -------------
    emb = emb_table.astype(compute_dtype)
    if (V_pad, D_pad) != (V, D):
        emb = jnp.pad(emb, ((0, V_pad - V), (0, D_pad - D)))

    tm = _choose_tile_m(M, tile_m, traits["num_tc"])
    # Shrink the tile until blocks + table + in-kernel intermediates fit the
    # per-generation VMEM budget.
    while tm > 8 and _matmul_vmem_bytes(tm, L, V_pad, D_pad, table_bytes,
                                        vpu_bytes, cd_bytes,
                                        pooling_strat) > vmem_cap:
        tm = max(8, _round_up(tm // 2, 8))
    M_pad = _round_up(M, tm)
    if M_pad != M:
        tok = jnp.pad(tok, ((0, M_pad - M), (0, 0)),
                      constant_values=padding_token)

    if pooling_strat == "mean":
        kernel = functools.partial(_mean_pool_kernel,
                                   padding_token=padding_token,
                                   vpu_dtype=vpu_dtype)
        flops = 2 * M_pad * V_pad * D_pad
    else:
        kernel = functools.partial(_max_pool_kernel, vpu_dtype=vpu_dtype)
        flops = 2 * M_pad * L * V_pad * D_pad

    vmem_needed = _matmul_vmem_bytes(tm, L, V_pad, D_pad, table_bytes,
                                     vpu_bytes, cd_bytes, pooling_strat)
    vmem_limit = int(min(max(int((vmem_needed + table_bytes) * 1.25), 32 << 20),
                         vmem_cap))
    cost = pl.CostEstimate(
        flops=flops, transcendentals=0,
        bytes_accessed=M_pad * L * 4 + table_bytes + M_pad * D_pad * 4)

    def call(table_spec):
        return pl.pallas_call(
            kernel,
            out_shape=jax.ShapeDtypeStruct((M_pad, D_pad), jnp.float32),
            grid_spec=pltpu.PrefetchScalarGridSpec(
                num_scalar_prefetch=0,
                grid=(M_pad // tm,),
                in_specs=[pl.BlockSpec((tm, L), lambda i: (i, 0)),  # token tile
                          table_spec],                              # full table
                out_specs=pl.BlockSpec((tm, D_pad), lambda i: (i, 0))),
            compiler_params=pltpu.CompilerParams(
                dimension_semantics=("parallel",),
                vmem_limit_bytes=vmem_limit),
            cost_estimate=cost,
        )(tok, emb)

    try:
        # Constant index_map => the table is DMA'd once; Buffered(1) keeps a
        # single VMEM copy instead of the default double buffer (halves the
        # dominant VMEM consumer -- matters most on v7x's 64 MiB).
        out = call(pl.BlockSpec((V_pad, D_pad), lambda i: (0, 0),
                                pipeline_mode=pl.Buffered(1)))
    except Exception:
        # Fallback for toolchains without BlockSpec.pipeline_mode support.
        out = call(pl.BlockSpec((V_pad, D_pad), lambda i: (0, 0)))

    return out[:M, :D].reshape(b, nk, D)


def _reference(x, emb_table, pooling_strat, padding_token):
    emb = emb_table[x]                                     # (b, NK, L, D)
    if pooling_strat == "mean":
        seq_lens = jnp.sum((x != padding_token).astype(jnp.float32),
                           axis=-1, keepdims=True)
        return jnp.sum(emb, axis=2) / seq_lens
    return jnp.max(emb, axis=2)


if __name__ == "__main__":
    key = jax.random.PRNGKey(0)
    k_tok, k_emb, k_tok2, k_emb2 = jax.random.split(key, 4)
    padding_token = 0

    def make_table(k, V, D):
        w = 2.0 * jax.random.uniform(k, (V, D), dtype=jnp.float32) - 1.0
        # Round onto the bf16 grid so the f32 reference and the bf16 kernel
        # agree to f32-accumulation rounding.  With raw f32 GloVe/w2v weights
        # pass compute_dtype=jnp.float32 instead.
        w = w.astype(jnp.bfloat16).astype(jnp.float32)
        return w.at[padding_token, :].set(0.0)            # PAD row is zeros

    def make_tokens(k, b, nk, L, V):
        t = jax.random.randint(k, (b, nk, L), 0, V, dtype=jnp.int32)
        return t.at[:, :, 0].set(jnp.maximum(t[:, :, 0], 1))  # >=1 non-PAD token

    # 1) Small vocabulary -> one-hot @ table MXU path.
    b, nk, L, V, D = 2, 8, 8, 32, 128
    emb_small = make_table(k_emb, V, D)
    x_small = make_tokens(k_tok, b, nk, L, V)

    # 2) Larger vocabulary -> HBM row-gather path (forced here; auto-dispatch
    #    kicks in at realistic vocabulary / table sizes).
    b2, nk2, L2, V2, D2 = 2, 6, 8, 500, 96
    emb_big = make_table(k_emb2, V2, D2)
    x_big = make_tokens(k_tok2, b2, nk2, L2, V2)

    cases = [("matmul", x_small, emb_small, None),
             ("gather", x_big, emb_big, True)]
    for name, x, emb_table, force_gather in cases:
        for strat in ("mean", "max"):
            out = word_embedding_forward(
                x, emb_table, pooling_strat=strat, padding_token=padding_token,
                use_gather=force_gather)
            out = jax.block_until_ready(out)
            ref = _reference(x, emb_table, strat, padding_token)
            np.testing.assert_allclose(np.asarray(out), np.asarray(ref),
                                       rtol=1e-5, atol=1e-5)
            assert out.shape == (x.shape[0], x.shape[1], emb_table.shape[1])

    print("KERNEL_OK")
</pallas_src>

<mosaic_0001>
module attributes {stable_mosaic.version = 11 : i64} {
  func.func @_mean_pool_kernel(%arg0: i32, %arg1: memref<16x8xi32, #tpu.memory_space<vmem>>, %arg2: memref<128x128xbf16, #tpu.memory_space<vmem>>, %arg3: memref<16x128xf32, #tpu.memory_space<vmem>>) attributes {dimension_semantics = [#tpu.dimension_semantics<parallel>], iteration_bounds = array<i64: 1>, scalar_prefetch = 0 : i64, scratch_operands = 0 : i64, tpu.core_type = #tpu.core_type<tc>, window_params = [{transform_indices = @transform_0, window_bounds = array<i64: 16, 8>}, {pipeline_mode = #tpu.pipeline_mode<synchronous>, transform_indices = @transform_1, window_bounds = array<i64: 128, 128>}, {transform_indices = @transform_2, window_bounds = array<i64: 16, 128>}]} {
    %c0 = arith.constant 0 : index
    %c0_0 = arith.constant 0 : index
    %0 = vector.load %arg1[%c0, %c0_0] : memref<16x8xi32, #tpu.memory_space<vmem>>, vector<16x8xi32>
    %1 = tpu.iota {dimensions = array<i32: 1>} : vector<16x128xi32>
    %cst = arith.constant 0.000000e+00 : f32
    %2 = vector.broadcast %cst : f32 to vector<16x128xf32>
    %3 = vector.extract_strided_slice %0 {offsets = [0, 0], sizes = [16, 1], strides = [1, 1]} : vector<16x8xi32> to vector<16x1xi32>
    %4 = vector.broadcast %3 : vector<16x1xi32> to vector<16x128xi32>
    %5 = arith.cmpi eq, %4, %1 : vector<16x128xi32>
    %6 = arith.extui %5 : vector<16x128xi1> to vector<16x128xi32>
    %7 = arith.sitofp %6 : vector<16x128xi32> to vector<16x128xf32>
    %8 = arith.addf %2, %7 : vector<16x128xf32>
    %9 = vector.extract_strided_slice %0 {offsets = [0, 1], sizes = [16, 1], strides = [1, 1]} : vector<16x8xi32> to vector<16x1xi32>
    %10 = vector.broadcast %9 : vector<16x1xi32> to vector<16x128xi32>
    %11 = arith.cmpi eq, %10, %1 : vector<16x128xi32>
    %12 = arith.extui %11 : vector<16x128xi1> to vector<16x128xi32>
    %13 = arith.sitofp %12 : vector<16x128xi32> to vector<16x128xf32>
    %14 = arith.addf %8, %13 : vector<16x128xf32>
    %15 = vector.extract_strided_slice %0 {offsets = [0, 2], sizes = [16, 1], strides = [1, 1]} : vector<16x8xi32> to vector<16x1xi32>
    %16 = vector.broadcast %15 : vector<16x1xi32> to vector<16x128xi32>
    %17 = arith.cmpi eq, %16, %1 : vector<16x128xi32>
    %18 = arith.extui %17 : vector<16x128xi1> to vector<16x128xi32>
    %19 = arith.sitofp %18 : vector<16x128xi32> to vector<16x128xf32>
    %20 = arith.addf %14, %19 : vector<16x128xf32>
    %21 = vector.extract_strided_slice %0 {offsets = [0, 3], sizes = [16, 1], strides = [1, 1]} : vector<16x8xi32> to vector<16x1xi32>
    %22 = vector.broadcast %21 : vector<16x1xi32> to vector<16x128xi32>
    %23 = arith.cmpi eq, %22, %1 : vector<16x128xi32>
    %24 = arith.extui %23 : vector<16x128xi1> to vector<16x128xi32>
    %25 = arith.sitofp %24 : vector<16x128xi32> to vector<16x128xf32>
    %26 = arith.addf %20, %25 : vector<16x128xf32>
    %27 = vector.extract_strided_slice %0 {offsets = [0, 4], sizes = [16, 1], strides = [1, 1]} : vector<16x8xi32> to vector<16x1xi32>
    %28 = vector.broadcast %27 : vector<16x1xi32> to vector<16x128xi32>
    %29 = arith.cmpi eq, %28, %1 : vector<16x128xi32>
    %30 = arith.extui %29 : vector<16x128xi1> to vector<16x128xi32>
    %31 = arith.sitofp %30 : vector<16x128xi32> to vector<16x128xf32>
    %32 = arith.addf %26, %31 : vector<16x128xf32>
    %33 = vector.extract_strided_slice %0 {offsets = [0, 5], sizes = [16, 1], strides = [1, 1]} : vector<16x8xi32> to vector<16x1xi32>
    %34 = vector.broadcast %33 : vector<16x1xi32> to vector<16x128xi32>
    %35 = arith.cmpi eq, %34, %1 : vector<16x128xi32>
    %36 = arith.extui %35 : vector<16x128xi1> to vector<16x128xi32>
    %37 = arith.sitofp %36 : vector<16x128xi32> to vector<16x128xf32>
    %38 = arith.addf %32, %37 : vector<16x128xf32>
    %39 = vector.extract_strided_slice %0 {offsets = [0, 6], sizes = [16, 1], strides = [1, 1]} : vector<16x8xi32> to vector<16x1xi32>
    %40 = vector.broadcast %39 : vector<16x1xi32> to vector<16x128xi32>
    %41 = arith.cmpi eq, %40, %1 : vector<16x128xi32>
    %42 = arith.extui %41 : vector<16x128xi1> to vector<16x128xi32>
    %43 = arith.sitofp %42 : vector<16x128xi32> to vector<16x128xf32>
    %44 = arith.addf %38, %43 : vector<16x128xf32>
    %45 = vector.extract_strided_slice %0 {offsets = [0, 7], sizes = [16, 1], strides = [1, 1]} : vector<16x8xi32> to vector<16x1xi32>
    %46 = vector.broadcast %45 : vector<16x1xi32> to vector<16x128xi32>
    %47 = arith.cmpi eq, %46, %1 : vector<16x128xi32>
    %48 = arith.extui %47 : vector<16x128xi1> to vector<16x128xi32>
    %49 = arith.sitofp %48 : vector<16x128xi32> to vector<16x128xf32>
    %50 = arith.addf %44, %49 : vector<16x128xf32>
    %51 = arith.truncf %50 : vector<16x128xf32> to vector<16x128xbf16>
    %c0_1 = arith.constant 0 : index
    %c0_2 = arith.constant 0 : index
    %52 = vector.load %arg2[%c0_1, %c0_2] : memref<128x128xbf16, #tpu.memory_space<vmem>>, vector<128x128xbf16>
    %cst_3 = arith.constant dense<0.000000e+00> : vector<16x128xf32>
    %53 = tpu.matmul %51, %52, %cst_3 {dimension_numbers = #tpu.dot_dimension_numbers<[1], [0], [0], [1], [0, 0, 1, 1], [], []>} : vector<16x128xbf16>, vector<128x128xbf16>, vector<16x128xf32> -> vector<16x128xf32>
    %c0_i32 = arith.constant 0 : i32
    %54 = vector.broadcast %c0_i32 : i32 to vector<16x8xi32>
    %55 = arith.cmpi ne, %0, %54 : vector<16x8xi32>
    %56 = arith.extui %55 : vector<16x8xi1> to vector<16x8xi32>
    %57 = arith.sitofp %56 : vector<16x8xi32> to vector<16x8xf32>
    %cst_4 = arith.constant dense<0.000000e+00> : vector<16xf32>
    %58 = vector.multi_reduction <add>, %57, %cst_4 [1] : vector<16x8xf32> to vector<16xf32>
    %59 = vector.shape_cast %58 : vector<16xf32> to vector<16x1xf32>
    %cst_5 = arith.constant 1.000000e+00 : f32
    %60 = vector.broadcast %cst_5 : f32 to vector<16x1xf32>
    %61 = arith.maximumf %59, %60 : vector<16x1xf32>
    %cst_6 = arith.constant 1.000000e+00 : f32
    %62 = vector.broadcast %cst_6 : f32 to vector<16x1xf32>
    %63 = arith.divf %62, %61 : vector<16x1xf32>
    %64 = vector.broadcast %63 : vector<16x1xf32> to vector<16x128xf32>
    %65 = arith.mulf %53, %64 : vector<16x128xf32>
    %c0_7 = arith.constant 0 : index
    %c0_8 = arith.constant 0 : index
    %66 = vector.load %arg3[%c0_7, %c0_8] : memref<16x128xf32, #tpu.memory_space<vmem>>, vector<16x128xf32>
    tpu.vector_store %arg3[%c0_7, %c0_8], %65 {strides = array<i32>} : memref<16x128xf32, #tpu.memory_space<vmem>>, vector<16x128xf32>,
    return
  }
  func.func @transform_0(%arg0: i32) -> (i32, i32) {
    %c0_i32 = arith.constant 0 : i32
    %c0_i32_0 = arith.constant 0 : i32
    return %arg0, %c0_i32 : i32, i32
  }
  func.func @transform_1(%arg0: i32) -> (i32, i32) {
    %c0_i32 = arith.constant 0 : i32
    %c0_i32_0 = arith.constant 0 : i32
    %c0_i32_1 = arith.constant 0 : i32
    return %c0_i32, %c0_i32_0 : i32, i32
  }
  func.func @transform_2(%arg0: i32) -> (i32, i32) {
    %c0_i32 = arith.constant 0 : i32
    %c0_i32_0 = arith.constant 0 : i32
    return %arg0, %c0_i32 : i32, i32
  }
}

module attributes {stable_mosaic.version = 11 : i64} {
  func.func @_mean_pool_kernel(%arg0: i32, %arg1: memref<16x8xi32, #tpu.memory_space<vmem>>, %arg2: memref<128x128xbf16, #tpu.memory_space<vmem>>, %arg3: memref<16x128xf32, #tpu.memory_space<vmem>>) attributes {dimension_semantics = [#tpu.dimension_semantics<parallel>], iteration_bounds = array<i64: 1>, scalar_prefetch = 0 : i64, scratch_operands = 0 : i64, tpu.core_type = #tpu.core_type<tc>, window_params = [{transform_indices = @transform_0, window_bounds = array<i64: 16, 8>}, {pipeline_mode = #tpu.pipeline_mode<synchronous>, transform_indices = @transform_1, window_bounds = array<i64: 128, 128>}, {transform_indices = @transform_2, window_bounds = array<i64: 16, 128>}]} {
    %c0 = arith.constant 0 : index
    %c0_0 = arith.constant 0 : index
    %0 = vector.load %arg1[%c0, %c0_0] : memref<16x8xi32, #tpu.memory_space<vmem>>, vector<16x8xi32>
    %1 = tpu.iota {dimensions = array<i32: 1>} : vector<16x128xi32>
    %cst = arith.constant 0.000000e+00 : f32
    %2 = vector.broadcast %cst : f32 to vector<16x128xf32>
    %3 = vector.extract_strided_slice %0 {offsets = [0, 0], sizes = [16, 1], strides = [1, 1]} : vector<16x8xi32> to vector<16x1xi32>
    %4 = vector.broadcast %3 : vector<16x1xi32> to vector<16x128xi32>
    %5 = arith.cmpi eq, %4, %1 : vector<16x128xi32>
    %6 = arith.extui %5 : vector<16x128xi1> to vector<16x128xi32>
    %7 = arith.sitofp %6 : vector<16x128xi32> to vector<16x128xf32>
    %8 = arith.addf %2, %7 : vector<16x128xf32>
    %9 = vector.extract_strided_slice %0 {offsets = [0, 1], sizes = [16, 1], strides = [1, 1]} : vector<16x8xi32> to vector<16x1xi32>
    %10 = vector.broadcast %9 : vector<16x1xi32> to vector<16x128xi32>
    %11 = arith.cmpi eq, %10, %1 : vector<16x128xi32>
    %12 = arith.extui %11 : vector<16x128xi1> to vector<16x128xi32>
    %13 = arith.sitofp %12 : vector<16x128xi32> to vector<16x128xf32>
    %14 = arith.addf %8, %13 : vector<16x128xf32>
    %15 = vector.extract_strided_slice %0 {offsets = [0, 2], sizes = [16, 1], strides = [1, 1]} : vector<16x8xi32> to vector<16x1xi32>
    %16 = vector.broadcast %15 : vector<16x1xi32> to vector<16x128xi32>
    %17 = arith.cmpi eq, %16, %1 : vector<16x128xi32>
    %18 = arith.extui %17 : vector<16x128xi1> to vector<16x128xi32>
    %19 = arith.sitofp %18 : vector<16x128xi32> to vector<16x128xf32>
    %20 = arith.addf %14, %19 : vector<16x128xf32>
    %21 = vector.extract_strided_slice %0 {offsets = [0, 3], sizes = [16, 1], strides = [1, 1]} : vector<16x8xi32> to vector<16x1xi32>
    %22 = vector.broadcast %21 : vector<16x1xi32> to vector<16x128xi32>
    %23 = arith.cmpi eq, %22, %1 : vector<16x128xi32>
    %24 = arith.extui %23 : vector<16x128xi1> to vector<16x128xi32>
    %25 = arith.sitofp %24 : vector<16x128xi32> to vector<16x128xf32>
    %26 = arith.addf %20, %25 : vector<16x128xf32>
    %27 = vector.extract_strided_slice %0 {offsets = [0, 4], sizes = [16, 1], strides = [1, 1]} : vector<16x8xi32> to vector<16x1xi32>
    %28 = vector.broadcast %27 : vector<16x1xi32> to vector<16x128xi32>
    %29 = arith.cmpi eq, %28, %1 : vector<16x128xi32>
    %30 = arith.extui %29 : vector<16x128xi1> to vector<16x128xi32>
    %31 = arith.sitofp %30 : vector<16x128xi32> to vector<16x128xf32>
    %32 = arith.addf %26, %31 : vector<16x128xf32>
    %33 = vector.extract_strided_slice %0 {offsets = [0, 5], sizes = [16, 1], strides = [1, 1]} : vector<16x8xi32> to vector<16x1xi32>
    %34 = vector.broadcast %33 : vector<16x1xi32> to vector<16x128xi32>
    %35 = arith.cmpi eq, %34, %1 : vector<16x128xi32>
    %36 = arith.extui %35 : vector<16x128xi1> to vector<16x128xi32>
    %37 = arith.sitofp %36 : vector<16x128xi32> to vector<16x128xf32>
    %38 = arith.addf %32, %37 : vector<16x128xf32>
    %39 = vector.extract_strided_slice %0 {offsets = [0, 6], sizes = [16, 1], strides = [1, 1]} : vector<16x8xi32> to vector<16x1xi32>
    %40 = vector.broadcast %39 : vector<16x1xi32> to vector<16x128xi32>
    %41 = arith.cmpi eq, %40, %1 : vector<16x128xi32>
    %42 = arith.extui %41 : vector<16x128xi1> to vector<16x128xi32>
    %43 = arith.sitofp %42 : vector<16x128xi32> to vector<16x128xf32>
    %44 = arith.addf %38, %43 : vector<16x128xf32>
    %45 = vector.extract_strided_slice %0 {offsets = [0, 7], sizes = [16, 1], strides = [1, 1]} : vector<16x8xi32> to vector<16x1xi32>
    %46 = vector.broadcast %45 : vector<16x1xi32> to vector<16x128xi32>
    %47 = arith.cmpi eq, %46, %1 : vector<16x128xi32>
    %48 = arith.extui %47 : vector<16x128xi1> to vector<16x128xi32>
    %49 = arith.sitofp %48 : vector<16x128xi32> to vector<16x128xf32>
    %50 = arith.addf %44, %49 : vector<16x128xf32>
    %51 = arith.truncf %50 : vector<16x128xf32> to vector<16x128xbf16>
    %c0_1 = arith.constant 0 : index
    %c0_2 = arith.constant 0 : index
    %52 = vector.load %arg2[%c0_1, %c0_2] : memref<128x128xbf16, #tpu.memory_space<vmem>>, vector<128x128xbf16>
    %cst_3 = arith.constant dense<0.000000e+00> : vector<16x128xf32>
    %53 = tpu.matmul %51, %52, %cst_3 {dimension_numbers = #tpu.dot_dimension_numbers<[1], [0], [0], [1], [0, 0, 1, 1], [], []>} : vector<16x128xbf16>, vector<128x128xbf16>, vector<16x128xf32> -> vector<16x128xf32>
    %c0_i32 = arith.constant 0 : i32
    %54 = vector.broadcast %c0_i32 : i32 to vector<16x8xi32>
    %55 = arith.cmpi ne, %0, %54 : vector<16x8xi32>
    %56 = arith.extui %55 : vector<16x8xi1> to vector<16x8xi32>
    %57 = arith.sitofp %56 : vector<16x8xi32> to vector<16x8xf32>
    %cst_4 = arith.constant dense<0.000000e+00> : vector<16xf32>
    %58 = vector.multi_reduction <add>, %57, %cst_4 [1] : vector<16x8xf32> to vector<16xf32>
    %59 = vector.shape_cast %58 : vector<16xf32> to vector<16x1xf32>
    %cst_5 = arith.constant 1.000000e+00 : f32
    %60 = vector.broadcast %cst_5 : f32 to vector<16x1xf32>
    %61 = arith.maximumf %59, %60 : vector<16x1xf32>
    %cst_6 = arith.constant 1.000000e+00 : f32
    %62 = vector.broadcast %cst_6 : f32 to vector<16x1xf32>
    %63 = arith.divf %62, %61 : vector<16x1xf32>
    %64 = vector.broadcast %63 : vector<16x1xf32> to vector<16x128xf32>
    %65 = arith.mulf %53, %64 : vector<16x128xf32>
    %c0_7 = arith.constant 0 : index
    %c0_8 = arith.constant 0 : index
    %66 = vector.load %arg3[%c0_7, %c0_8] : memref<16x128xf32, #tpu.memory_space<vmem>>, vector<16x128xf32>
    tpu.vector_store %arg3[%c0_7, %c0_8], %65 {strides = array<i32>} : memref<16x128xf32, #tpu.memory_space<vmem>>, vector<16x128xf32>,
    return
  }
  func.func @transform_0(%arg0: i32) -> (i32, i32) {
    %c0_i32 = arith.constant 0 : i32
    %c0_i32_0 = arith.constant 0 : i32
    return %arg0, %c0_i32 : i32, i32
  }
  func.func @transform_1(%arg0: i32) -> (i32, i32) {
    %c0_i32 = arith.constant 0 : i32
    %c0_i32_0 = arith.constant 0 : i32
    %c0_i32_1 = arith.constant 0 : i32
    return %c0_i32, %c0_i32_0 : i32, i32
  }
  func.func @transform_2(%arg0: i32) -> (i32, i32) {
    %c0_i32 = arith.constant 0 : i32
    %c0_i32_0 = arith.constant 0 : i32
    return %arg0, %c0_i32 : i32, i32
  }
}

</mosaic_0001>

<llo_original>
// kernel: tpu_custom_call.1
$region0: #{tpu_custom_call.1}
  #allocation0 [shape = 'u32[]', space=smem, size = 0x4, offset = 0x4, fixed_abs, tag = 'smem constant byte address 0x4 - core index']
  #allocation1 [shape = 'u32[72,128]{1,0:T(1,128)}', space=vmem, size = 0x9000, scoped, tag = 'internal scratch']
  %s0 = inlined_call_operand.vmem [shape: s32[16,8], index: 0, kind: input, shape index: {}]
  %s1 = inlined_call_operand.hbm [shape: bf16[128,128], index: 1, kind: input, shape index: {}]
  %s2 = inlined_call_operand.hbm [shape: f32[16,128], index: 2, kind: output, shape index: {}]
  %s3 = sld [smem:[#allocation0]]
  $region22: #{tpu_custom_call.1} parent=0
    _
  %s5 = ssub.s32 1, %s3
  %s6 = scalar_select 0, %s5, %s3
  $region1: #{tpu_custom_call.1} parent=0
    #allocation2 [shape = 'u8[32768]{0}', space=vmem, size = 0x8000, scoped, tag = 'input window, operand 1, single buffered']
    #allocation3 [shape = 's32[1]{0}', space=sflag, size = 0x4, scoped, tag = 'scoped memory for tpu_custom_call.1']
    #allocation4 [shape = 's32[1]{0}', space=sflag, size = 0x4, scoped, tag = 'scoped memory for tpu_custom_call.1']
    #allocation5 [shape = 'u8[8192]{0}', space=vmem, size = 0x2000, scoped, tag = 'output window, operand 0, single buffered']
    %7 = vsyncpa [#allocation3], 0
    %8 = vsyncpa [#allocation4], 0
    // Predicated region
    $region2: #{tpu_custom_call.1} parent=1 // pred_check
      _
    $region3: #{tpu_custom_call.1} parent=1 // pred_check_branch
      %10 = sbr.rel (0) target = $region5
    $region4: #{tpu_custom_call.1} parent=1 // pred_region
      _
    $region5: #{tpu_custom_call.1} parent=1 // pred_fallthru
      _
    // Predicated region
    $region6: #{tpu_custom_call.1} parent=1 // pred_check
      _
    $region7: #{tpu_custom_call.1} parent=1 // pred_check_branch
      %12 = sbr.rel (0) target = $region9
    $region8: #{tpu_custom_call.1} parent=1 // pred_region
      %14 = vsyncadd [#allocation3], 0
      %s15 = sshll.u32 %s1, 4
      %s16 = int_to_ptr.hbm [resolvable:$true] %s15
      %s17 = sshll.u32 [#allocation2], 4
      %s18 = int_to_ptr.vmem [resolvable:$true] %s17
      %23 = dma.hbm_to_vmem [thread:$0]  %s16, 1024, %s18, [#allocation3], 64, 64, 4
    $region9: #{tpu_custom_call.1} parent=1 // pred_fallthru
      _
    // Predicated region
    $region10: #{tpu_custom_call.1} parent=1 // pred_check
      _
    $region11: #{tpu_custom_call.1} parent=1 // pred_check_branch
      %25 = sbr.rel (0) target = $region13
    $region12: #{tpu_custom_call.1} parent=1 // pred_region
      %27 = dma.done [#allocation3], 1024
    $region13: #{tpu_custom_call.1} parent=1 // pred_fallthru
      _
    %v28 = vld [vmem:[%s0] sm:$0xff]
    %v29 = vld [vmem:[%s0 + $0x8] sm:$0xff]
    %v30 = vlaneseq
    %v31 = vand.u32 %v30, 127
    %32 = vset.pattern.permute.xlu0 0
    %33 = vperm.xlu0 %32, %v28
    %v34 = vpop.permute.xlu0 %33
    %35 = vset.pattern.permute.xlu0 0
    %36 = vperm.xlu0 %35, %v29
    %v37 = vpop.permute.xlu0 %36
    %vm38 = vcmp.eq.s32.totalorder %v34, %v31
    %vm39 = vcmp.eq.s32.totalorder %v37, %v31
    %v40 = vsel %vm38, 1, 0
    %v41 = vsel %vm39, 1, 0
    %v42 = vcvt.s32.f32 %v40
    %v43 = vcvt.s32.f32 %v41
    %v44 = vadd.f32 %v42, 0.0
    %v45 = vadd.f32 %v43, 0.0
    %46 = vset.pattern.permute.xlu0 1
    %47 = vperm.xlu0 %46, %v28
    %v48 = vpop.permute.xlu0 %47
    %49 = vset.pattern.permute.xlu0 1
    %50 = vperm.xlu0 %49, %v29
    %v51 = vpop.permute.xlu0 %50
    %vm52 = vcmp.eq.s32.totalorder %v48, %v31
    %vm53 = vcmp.eq.s32.totalorder %v51, %v31
    %v54 = vsel %vm52, 1, 0
    %v55 = vsel %vm53, 1, 0
    %v56 = vcvt.s32.f32 %v54
    %v57 = vcvt.s32.f32 %v55
    %v58 = vadd.f32 %v44, %v56
    %v59 = vadd.f32 %v45, %v57
    %60 = vset.pattern.permute.xlu0 2
    %61 = vperm.xlu0 %60, %v28
    %v62 = vpop.permute.xlu0 %61
    %63 = vset.pattern.permute.xlu0 2
    %64 = vperm.xlu0 %63, %v29
    %v65 = vpop.permute.xlu0 %64
    %vm66 = vcmp.eq.s32.totalorder %v62, %v31
    %vm67 = vcmp.eq.s32.totalorder %v65, %v31
    %v68 = vsel %vm66, 1, 0
    %v69 = vsel %vm67, 1, 0
    %v70 = vcvt.s32.f32 %v68
    %v71 = vcvt.s32.f32 %v69
    %v72 = vadd.f32 %v58, %v70
    %v73 = vadd.f32 %v59, %v71
    %74 = vset.pattern.permute.xlu0 3
    %75 = vperm.xlu0 %74, %v28
    %v76 = vpop.permute.xlu0 %75
    %77 = vset.pattern.permute.xlu0 3
    %78 = vperm.xlu0 %77, %v29
    %v79 = vpop.permute.xlu0 %78
    %vm80 = vcmp.eq.s32.totalorder %v76, %v31
    %vm81 = vcmp.eq.s32.totalorder %v79, %v31
    %v82 = vsel %vm80, 1, 0
    %v83 = vsel %vm81, 1, 0
    %v84 = vcvt.s32.f32 %v82
    %v85 = vcvt.s32.f32 %v83
    %v86 = vadd.f32 %v72, %v84
    %v87 = vadd.f32 %v73, %v85
    %88 = vset.pattern.permute.xlu0 4
    %89 = vperm.xlu0 %88, %v28
    %v90 = vpop.permute.xlu0 %89
    %91 = vset.pattern.permute.xlu0 4
    %92 = vperm.xlu0 %91, %v29
    %v93 = vpop.permute.xlu0 %92
    %vm94 = vcmp.eq.s32.totalorder %v90, %v31
    %vm95 = vcmp.eq.s32.totalorder %v93, %v31
    %v96 = vsel %vm94, 1, 0
    %v97 = vsel %vm95, 1, 0
    %v98 = vcvt.s32.f32 %v96
    %v99 = vcvt.s32.f32 %v97
    %v100 = vadd.f32 %v86, %v98
    %v101 = vadd.f32 %v87, %v99
    %102 = vset.pattern.permute.xlu0 5
    %103 = vperm.xlu0 %102, %v28
    %v104 = vpop.permute.xlu0 %103
    %105 = vset.pattern.permute.xlu0 5
    %106 = vperm.xlu0 %105, %v29
    %v107 = vpop.permute.xlu0 %106
    %vm108 = vcmp.eq.s32.totalorder %v104, %v31
    %vm109 = vcmp.eq.s32.totalorder %v107, %v31
    %v110 = vsel %vm108, 1, 0
    %v111 = vsel %vm109, 1, 0
    %v112 = vcvt.s32.f32 %v110
    %v113 = vcvt.s32.f32 %v111
    %v114 = vadd.f32 %v100, %v112
    %v115 = vadd.f32 %v101, %v113
    %116 = vset.pattern.permute.xlu0 6
    %117 = vperm.xlu0 %116, %v28
    %v118 = vpop.permute.xlu0 %117
    %119 = vset.pattern.permute.xlu0 6
    %120 = vperm.xlu0 %119, %v29
    %v121 = vpop.permute.xlu0 %120
    %vm122 = vcmp.eq.s32.totalorder %v118, %v31
    %vm123 = vcmp.eq.s32.totalorder %v121, %v31
    %v124 = vsel %vm122, 1, 0
    %v125 = vsel %vm123, 1, 0
    %v126 = vcvt.s32.f32 %v124
    %v127 = vcvt.s32.f32 %v125
    %v128 = vadd.f32 %v114, %v126
    %v129 = vadd.f32 %v115, %v127
    %130 = vset.pattern.permute.xlu0 7
    %131 = vperm.xlu0 %130, %v28
    %v132 = vpop.permute.xlu0 %131
    %133 = vset.pattern.permute.xlu0 7
    %134 = vperm.xlu0 %133, %v29
    %v135 = vpop.permute.xlu0 %134
    %vm136 = vcmp.eq.s32.totalorder %v132, %v31
    %vm137 = vcmp.eq.s32.totalorder %v135, %v31
    %v138 = vsel %vm136, 1, 0
    %v139 = vsel %vm137, 1, 0
    %v140 = vcvt.s32.f32 %v138
    %v141 = vcvt.s32.f32 %v139
    %v142 = vadd.f32 %v128, %v140
    %v143 = vadd.f32 %v129, %v141
    %v144 = vpack.c.bf16 %v143, %v142
    %v145 = vld [vmem:[#allocation2] sm:$0xf]
    %v146 = vld [vmem:[#allocation2 + $0x4] sm:$0xf]
    %v147 = vld [vmem:[#allocation2 + $0x8] sm:$0xf]
    %v148 = vld [vmem:[#allocation2 + $0xc] sm:$0xf]
    %v149 = vld [vmem:[#allocation2 + $0x10] sm:$0xf]
    %v150 = vld [vmem:[#allocation2 + $0x14] sm:$0xf]
    %v151 = vld [vmem:[#allocation2 + $0x18] sm:$0xf]
    %v152 = vld [vmem:[#allocation2 + $0x1c] sm:$0xf]
    %v153 = vld [vmem:[#allocation2 + $0x20] sm:$0xf]
    %v154 = vld [vmem:[#allocation2 + $0x24] sm:$0xf]
    %v155 = vld [vmem:[#allocation2 + $0x28] sm:$0xf]
    %v156 = vld [vmem:[#allocation2 + $0x2c] sm:$0xf]
    %v157 = vld [vmem:[#allocation2 + $0x30] sm:$0xf]
    %v158 = vld [vmem:[#allocation2 + $0x34] sm:$0xf]
    %v159 = vld [vmem:[#allocation2 + $0x38] sm:$0xf]
    %v160 = vld [vmem:[#allocation2 + $0x3c] sm:$0xf]
    %v177 = vunpack.c.l.b16 %v145
    %v178 = vunpack.c.l.b16 %v146
    %v179 = vunpack.c.l.b16 %v147
    %v180 = vunpack.c.l.b16 %v148
    %v181 = vunpack.c.l.b16 %v149
    %v182 = vunpack.c.l.b16 %v150
    %v183 = vunpack.c.l.b16 %v151
    %v184 = vunpack.c.l.b16 %v152
    %v185 = vunpack.c.l.b16 %v153
    %v186 = vunpack.c.l.b16 %v154
    %v187 = vunpack.c.l.b16 %v155
    %v188 = vunpack.c.l.b16 %v156
    %v189 = vunpack.c.l.b16 %v157
    %v190 = vunpack.c.l.b16 %v158
    %v191 = vunpack.c.l.b16 %v159
    %v192 = vunpack.c.l.b16 %v160
    %v193 = vpack.c.b16 %v178, %v177
    %v194 = vpack.c.b16 %v180, %v179
    %v195 = vpack.c.b16 %v182, %v181
    %v196 = vpack.c.b16 %v184, %v183
    %v197 = vpack.c.b16 %v186, %v185
    %v198 = vpack.c.b16 %v188, %v187
    %v199 = vpack.c.b16 %v190, %v189
    %v200 = vpack.c.b16 %v192, %v191
    %209 = vmatpush.bf16.msra.mxu0 %v200
    %210 = vmatpush.bf16.msra.mxu0 %v199
    %211 = vmatpush.bf16.msra.mxu0 %v198
    %212 = vmatpush.bf16.msra.mxu0 %v197
    %213 = vmatpush.bf16.msra.mxu0 %v196
    %214 = vmatpush.bf16.msra.mxu0 %v195
    %215 = vmatpush.bf16.msra.mxu0 %v194
    %216 = vmatpush.bf16.msra.mxu0 %v193
    %217 = vmatmul.bf16.gmra.mxu0 %v144
    %v218 = vpop.f32.mrf.mxu0
    %v219 = vadd.f32 0.0, %v218
    %v220 = vpop.f32.mrf.mxu0
    %v221 = vadd.f32 0.0, %v220
    %222 = vdwg.mxu0
    %vm223 = vcmp.ne.s32.totalorder %v28, 0
    %vm224 = vcmp.ne.s32.totalorder %v29, 0
    %v225 = vsel %vm223, 1, 0
    %v226 = vsel %vm224, 1, 0
    %v227 = vcvt.s32.f32 %v225
    %v228 = vcvt.s32.f32 %v226
    %vm229 = vcmask 64512
    %v230 = vsel %vm229, %v227, 0.0
    %231 = vadd.xlane.f32.xlu0 %v230
    %v232 = vpop.xlane.xlu0 %231
    %v233 = vsel %vm229, %v228, 0.0
    %234 = vadd.xlane.f32.xlu0 %v233
    %v235 = vpop.xlane.xlu0 %234
    %v236 = vmax.f32 %v232, 1.0
    %v237 = vmax.f32 %v235, 1.0
    %v238 = vrcp.pop %v236
    %v239 = vmul.f32 %v236, %v238
    %v240 = vsub.f32 1.0, %v239
    %v241 = vmul.f32 %v238, %v240
    %v242 = vadd.f32 %v238, %v241
    %vm243 = vweird.f32 %v236
    %vm244 = vweird.f32 %v238
    %vm245 = vmor %vm243, %vm244
    %v246 = vsel %vm245, %v238, %v242
    %v247 = vand.u32 2147483647, %v236
    %vm248 = vcmp.eq.f32.partialorder %v247, 8.507059e+37
    %v249 = vand.u32 %v236, 2147483648
    %v250 = vor.u32 1.1754944e-38, %v249
    %v251 = vsel %vm248, %v250, %v246
    %v252 = vmul.f32 1.0, %v251
    %v253 = vrcp.pop %v237
    %v254 = vmul.f32 %v237, %v253
    %v255 = vsub.f32 1.0, %v254
    %v256 = vmul.f32 %v253, %v255
    %v257 = vadd.f32 %v253, %v256
    %vm258 = vweird.f32 %v237
    %vm259 = vweird.f32 %v253
    %vm260 = vmor %vm258, %vm259
    %v261 = vsel %vm260, %v253, %v257
    %v262 = vand.u32 2147483647, %v237
    %vm263 = vcmp.eq.f32.partialorder %v262, 8.507059e+37
    %v264 = vand.u32 %v237, 2147483648
    %v265 = vor.u32 1.1754944e-38, %v264
    %v266 = vsel %vm263, %v265, %v261
    %v267 = vmul.f32 1.0, %v266
    %v268 = vmul.f32 %v219, %v252
    %v269 = vmul.f32 %v221, %v267
    %270 = vst [vmem:[#allocation5] sm:$0xff] %v268
    %271 = vst [vmem:[#allocation5 + $0x8] sm:$0xff] %v269
    // Predicated region
    $region14: #{tpu_custom_call.1} parent=1 // pred_check
      _
    $region15: #{tpu_custom_call.1} parent=1 // pred_check_branch
      %273 = sbr.rel (0) target = $region17
    $region16: #{tpu_custom_call.1} parent=1 // pred_region
      %275 = vsyncadd [#allocation4], 0
      %s276 = sshll.u32 [#allocation5], 4
      %s277 = int_to_ptr.vmem [resolvable:$true] %s276
      %s278 = sshll.u32 %s2, 4
      %s279 = int_to_ptr.hbm [resolvable:$true] %s278
      %284 = dma.vmem_to_hbm [thread:$0]  %s277, 256, %s279, [#allocation4], 128, 128, 8
    $region17: #{tpu_custom_call.1} parent=1 // pred_fallthru
      _
    // Predicated region
    $region18: #{tpu_custom_call.1} parent=1 // pred_check
      _
    $region19: #{tpu_custom_call.1} parent=1 // pred_check_branch
      %286 = sbr.rel (0) target = $region21
    $region20: #{tpu_custom_call.1} parent=1 // pred_region
      %288 = dma.done [#allocation4], 256
    $region21: #{tpu_custom_call.1} parent=1 // pred_fallthru
      _
    %289 = vsyncpa [#allocation3], 1
    %290 = vsyncpa [#allocation4], 1

// kernel: tpu_custom_call.1
$region0: #{tpu_custom_call.1}
  #allocation0 [shape = 'u32[]', space=smem, size = 0x4, offset = 0x4, fixed_abs, tag = 'smem constant byte address 0x4 - core index']
  #allocation1 [shape = 'u32[72,128]{1,0:T(1,128)}', space=vmem, size = 0x9000, scoped, tag = 'internal scratch']
  %s0 = inlined_call_operand.vmem [shape: s32[16,8], index: 0, kind: input, shape index: {}]
  %s1 = inlined_call_operand.hbm [shape: bf16[128,128], index: 1, kind: input, shape index: {}]
  %s2 = inlined_call_operand.hbm [shape: f32[16,128], index: 2, kind: output, shape index: {}]
  %s3 = sld [smem:[#allocation0]]
  $region22: #{tpu_custom_call.1} parent=0
    _
  %s5 = ssub.s32 1, %s3
  %s6 = scalar_select 0, %s5, %s3
  $region1: #{tpu_custom_call.1} parent=0
    #allocation2 [shape = 'u8[32768]{0}', space=vmem, size = 0x8000, scoped, tag = 'input window, operand 1, single buffered']
    #allocation3 [shape = 's32[1]{0}', space=sflag, size = 0x4, scoped, tag = 'scoped memory for tpu_custom_call.1']
    #allocation4 [shape = 's32[1]{0}', space=sflag, size = 0x4, scoped, tag = 'scoped memory for tpu_custom_call.1']
    #allocation5 [shape = 'u8[8192]{0}', space=vmem, size = 0x2000, scoped, tag = 'output window, operand 0, single buffered']
    %7 = vsyncpa [#allocation3], 0
    %8 = vsyncpa [#allocation4], 0
    // Predicated region
    $region2: #{tpu_custom_call.1} parent=1 // pred_check
      _
    $region3: #{tpu_custom_call.1} parent=1 // pred_check_branch
      %10 = sbr.rel (0) target = $region5
    $region4: #{tpu_custom_call.1} parent=1 // pred_region
      _
    $region5: #{tpu_custom_call.1} parent=1 // pred_fallthru
      _
    // Predicated region
    $region6: #{tpu_custom_call.1} parent=1 // pred_check
      _
    $region7: #{tpu_custom_call.1} parent=1 // pred_check_branch
      %12 = sbr.rel (0) target = $region9
    $region8: #{tpu_custom_call.1} parent=1 // pred_region
      %14 = vsyncadd [#allocation3], 0
      %s15 = sshll.u32 %s1, 4
      %s16 = int_to_ptr.hbm [resolvable:$true] %s15
      %s17 = sshll.u32 [#allocation2], 4
      %s18 = int_to_ptr.vmem [resolvable:$true] %s17
      %23 = dma.hbm_to_vmem [thread:$0]  %s16, 1024, %s18, [#allocation3], 64, 64, 4
    $region9: #{tpu_custom_call.1} parent=1 // pred_fallthru
      _
    // Predicated region
    $region10: #{tpu_custom_call.1} parent=1 // pred_check
      _
    $region11: #{tpu_custom_call.1} parent=1 // pred_check_branch
      %25 = sbr.rel (0) target = $region13
    $region12: #{tpu_custom_call.1} parent=1 // pred_region
      %27 = dma.done [#allocation3], 1024
    $region13: #{tpu_custom_call.1} parent=1 // pred_fallthru
      _
    %v28 = vld [vmem:[%s0] sm:$0xff]
    %v29 = vld [vmem:[%s0 + $0x8] sm:$0xff]
    %v30 = vlaneseq
    %v31 = vand.u32 %v30, 127
    %32 = vset.pattern.permute.xlu0 0
    %33 = vperm.xlu0 %32, %v28
    %v34 = vpop.permute.xlu0 %33
    %35 = vset.pattern.permute.xlu0 0
    %36 = vperm.xlu0 %35, %v29
    %v37 = vpop.permute.xlu0 %36
    %vm38 = vcmp.eq.s32.totalorder %v34, %v31
    %vm39 = vcmp.eq.s32.totalorder %v37, %v31
    %v40 = vsel %vm38, 1, 0
    %v41 = vsel %vm39, 1, 0
    %v42 = vcvt.s32.f32 %v40
    %v43 = vcvt.s32.f32 %v41
    %v44 = vadd.f32 %v42, 0.0
    %v45 = vadd.f32 %v43, 0.0
    %46 = vset.pattern.permute.xlu0 1
    %47 = vperm.xlu0 %46, %v28
    %v48 = vpop.permute.xlu0 %47
    %49 = vset.pattern.permute.xlu0 1
    %50 = vperm.xlu0 %49, %v29
    %v51 = vpop.permute.xlu0 %50
    %vm52 = vcmp.eq.s32.totalorder %v48, %v31
    %vm53 = vcmp.eq.s32.totalorder %v51, %v31
    %v54 = vsel %vm52, 1, 0
    %v55 = vsel %vm53, 1, 0
    %v56 = vcvt.s32.f32 %v54
    %v57 = vcvt.s32.f32 %v55
    %v58 = vadd.f32 %v44, %v56
    %v59 = vadd.f32 %v45, %v57
    %60 = vset.pattern.permute.xlu0 2
    %61 = vperm.xlu0 %60, %v28
    %v62 = vpop.permute.xlu0 %61
    %63 = vset.pattern.permute.xlu0 2
    %64 = vperm.xlu0 %63, %v29
    %v65 = vpop.permute.xlu0 %64
    %vm66 = vcmp.eq.s32.totalorder %v62, %v31
    %vm67 = vcmp.eq.s32.totalorder %v65, %v31
    %v68 = vsel %vm66, 1, 0
    %v69 = vsel %vm67, 1, 0
    %v70 = vcvt.s32.f32 %v68
    %v71 = vcvt.s32.f32 %v69
    %v72 = vadd.f32 %v58, %v70
    %v73 = vadd.f32 %v59, %v71
    %74 = vset.pattern.permute.xlu0 3
    %75 = vperm.xlu0 %74, %v28
    %v76 = vpop.permute.xlu0 %75
    %77 = vset.pattern.permute.xlu0 3
    %78 = vperm.xlu0 %77, %v29
    %v79 = vpop.permute.xlu0 %78
    %vm80 = vcmp.eq.s32.totalorder %v76, %v31
    %vm81 = vcmp.eq.s32.totalorder %v79, %v31
    %v82 = vsel %vm80, 1, 0
    %v83 = vsel %vm81, 1, 0
    %v84 = vcvt.s32.f32 %v82
    %v85 = vcvt.s32.f32 %v83
    %v86 = vadd.f32 %v72, %v84
    %v87 = vadd.f32 %v73, %v85
    %88 = vset.pattern.permute.xlu0 4
    %89 = vperm.xlu0 %88, %v28
    %v90 = vpop.permute.xlu0 %89
    %91 = vset.pattern.permute.xlu0 4
    %92 = vperm.xlu0 %91, %v29
    %v93 = vpop.permute.xlu0 %92
    %vm94 = vcmp.eq.s32.totalorder %v90, %v31
    %vm95 = vcmp.eq.s32.totalorder %v93, %v31
    %v96 = vsel %vm94, 1, 0
    %v97 = vsel %vm95, 1, 0
    %v98 = vcvt.s32.f32 %v96
    %v99 = vcvt.s32.f32 %v97
    %v100 = vadd.f32 %v86, %v98
    %v101 = vadd.f32 %v87, %v99
    %102 = vset.pattern.permute.xlu0 5
    %103 = vperm.xlu0 %102, %v28
    %v104 = vpop.permute.xlu0 %103
    %105 = vset.pattern.permute.xlu0 5
    %106 = vperm.xlu0 %105, %v29
    %v107 = vpop.permute.xlu0 %106
    %vm108 = vcmp.eq.s32.totalorder %v104, %v31
    %vm109 = vcmp.eq.s32.totalorder %v107, %v31
    %v110 = vsel %vm108, 1, 0
    %v111 = vsel %vm109, 1, 0
    %v112 = vcvt.s32.f32 %v110
    %v113 = vcvt.s32.f32 %v111
    %v114 = vadd.f32 %v100, %v112
    %v115 = vadd.f32 %v101, %v113
    %116 = vset.pattern.permute.xlu0 6
    %117 = vperm.xlu0 %116, %v28
    %v118 = vpop.permute.xlu0 %117
    %119 = vset.pattern.permute.xlu0 6
    %120 = vperm.xlu0 %119, %v29
    %v121 = vpop.permute.xlu0 %120
    %vm122 = vcmp.eq.s32.totalorder %v118, %v31
    %vm123 = vcmp.eq.s32.totalorder %v121, %v31
    %v124 = vsel %vm122, 1, 0
    %v125 = vsel %vm123, 1, 0
    %v126 = vcvt.s32.f32 %v124
    %v127 = vcvt.s32.f32 %v125
    %v128 = vadd.f32 %v114, %v126
    %v129 = vadd.f32 %v115, %v127
    %130 = vset.pattern.permute.xlu0 7
    %131 = vperm.xlu0 %130, %v28
    %v132 = vpop.permute.xlu0 %131
    %133 = vset.pattern.permute.xlu0 7
    %134 = vperm.xlu0 %133, %v29
    %v135 = vpop.permute.xlu0 %134
    %vm136 = vcmp.eq.s32.totalorder %v132, %v31
    %vm137 = vcmp.eq.s32.totalorder %v135, %v31
    %v138 = vsel %vm136, 1, 0
    %v139 = vsel %vm137, 1, 0
    %v140 = vcvt.s32.f32 %v138
    %v141 = vcvt.s32.f32 %v139
    %v142 = vadd.f32 %v128, %v140
    %v143 = vadd.f32 %v129, %v141
    %v144 = vpack.c.bf16 %v143, %v142
    %v145 = vld [vmem:[#allocation2] sm:$0xf]
    %v146 = vld [vmem:[#allocation2 + $0x4] sm:$0xf]
    %v147 = vld [vmem:[#allocation2 + $0x8] sm:$0xf]
    %v148 = vld [vmem:[#allocation2 + $0xc] sm:$0xf]
    %v149 = vld [vmem:[#allocation2 + $0x10] sm:$0xf]
    %v150 = vld [vmem:[#allocation2 + $0x14] sm:$0xf]
    %v151 = vld [vmem:[#allocation2 + $0x18] sm:$0xf]
    %v152 = vld [vmem:[#allocation2 + $0x1c] sm:$0xf]
    %v153 = vld [vmem:[#allocation2 + $0x20] sm:$0xf]
    %v154 = vld [vmem:[#allocation2 + $0x24] sm:$0xf]
    %v155 = vld [vmem:[#allocation2 + $0x28] sm:$0xf]
    %v156 = vld [vmem:[#allocation2 + $0x2c] sm:$0xf]
    %v157 = vld [vmem:[#allocation2 + $0x30] sm:$0xf]
    %v158 = vld [vmem:[#allocation2 + $0x34] sm:$0xf]
    %v159 = vld [vmem:[#allocation2 + $0x38] sm:$0xf]
    %v160 = vld [vmem:[#allocation2 + $0x3c] sm:$0xf]
    %v177 = vunpack.c.l.b16 %v145
    %v178 = vunpack.c.l.b16 %v146
    %v179 = vunpack.c.l.b16 %v147
    %v180 = vunpack.c.l.b16 %v148
    %v181 = vunpack.c.l.b16 %v149
    %v182 = vunpack.c.l.b16 %v150
    %v183 = vunpack.c.l.b16 %v151
    %v184 = vunpack.c.l.b16 %v152
    %v185 = vunpack.c.l.b16 %v153
    %v186 = vunpack.c.l.b16 %v154
    %v187 = vunpack.c.l.b16 %v155
    %v188 = vunpack.c.l.b16 %v156
    %v189 = vunpack.c.l.b16 %v157
    %v190 = vunpack.c.l.b16 %v158
    %v191 = vunpack.c.l.b16 %v159
    %v192 = vunpack.c.l.b16 %v160
    %v193 = vpack.c.b16 %v178, %v177
    %v194 = vpack.c.b16 %v180, %v179
    %v195 = vpack.c.b16 %v182, %v181
    %v196 = vpack.c.b16 %v184, %v183
    %v197 = vpack.c.b16 %v186, %v185
    %v198 = vpack.c.b16 %v188, %v187
    %v199 = vpack.c.b16 %v190, %v189
    %v200 = vpack.c.b16 %v192, %v191
    %209 = vmatpush.bf16.msra.mxu0 %v200
    %210 = vmatpush.bf16.msra.mxu0 %v199
    %211 = vmatpush.bf16.msra.mxu0 %v198
    %212 = vmatpush.bf16.msra.mxu0 %v197
    %213 = vmatpush.bf16.msra.mxu0 %v196
    %214 = vmatpush.bf16.msra.mxu0 %v195
    %215 = vmatpush.bf16.msra.mxu0 %v194
    %216 = vmatpush.bf16.msra.mxu0 %v193
    %217 = vmatmul.bf16.gmra.mxu0 %v144
    %v218 = vpop.f32.mrf.mxu0
    %v219 = vadd.f32 0.0, %v218
    %v220 = vpop.f32.mrf.mxu0
    %v221 = vadd.f32 0.0, %v220
    %222 = vdwg.mxu0
    %vm223 = vcmp.ne.s32.totalorder %v28, 0
    %vm224 = vcmp.ne.s32.totalorder %v29, 0
    %v225 = vsel %vm223, 1, 0
    %v226 = vsel %vm224, 1, 0
    %v227 = vcvt.s32.f32 %v225
    %v228 = vcvt.s32.f32 %v226
    %vm229 = vcmask 64512
    %v230 = vsel %vm229, %v227, 0.0
    %231 = vadd.xlane.f32.xlu0 %v230
    %v232 = vpop.xlane.xlu0 %231
    %v233 = vsel %vm229, %v228, 0.0
    %234 = vadd.xlane.f32.xlu0 %v233
    %v235 = vpop.xlane.xlu0 %234
    %v236 = vmax.f32 %v232, 1.0
    %v237 = vmax.f32 %v235, 1.0
    %v238 = vrcp.pop %v236
    %v239 = vmul.f32 %v236, %v238
    %v240 = vsub.f32 1.0, %v239
    %v241 = vmul.f32 %v238, %v240
    %v242 = vadd.f32 %v238, %v241
    %vm243 = vweird.f32 %v236
    %vm244 = vweird.f32 %v238
    %vm245 = vmor %vm243, %vm244
    %v246 = vsel %vm245, %v238, %v242
    %v247 = vand.u32 2147483647, %v236
    %vm248 = vcmp.eq.f32.partialorder %v247, 8.507059e+37
    %v249 = vand.u32 %v236, 2147483648
    %v250 = vor.u32 1.1754944e-38, %v249
    %v251 = vsel %vm248, %v250, %v246
    %v252 = vmul.f32 1.0, %v251
    %v253 = vrcp.pop %v237
    %v254 = vmul.f32 %v237, %v253
    %v255 = vsub.f32 1.0, %v254
    %v256 = vmul.f32 %v253, %v255
    %v257 = vadd.f32 %v253, %v256
    %vm258 = vweird.f32 %v237
    %vm259 = vweird.f32 %v253
    %vm260 = vmor %vm258, %vm259
    %v261 = vsel %vm260, %v253, %v257
    %v262 = vand.u32 2147483647, %v237
    %vm263 = vcmp.eq.f32.partialorder %v262, 8.507059e+37
    %v264 = vand.u32 %v237, 2147483648
    %v265 = vor.u32 1.1754944e-38, %v264
    %v266 = vsel %vm263, %v265, %v261
    %v267 = vmul.f32 1.0, %v266
    %v268 = vmul.f32 %v219, %v252
    %v269 = vmul.f32 %v221, %v267
    %270 = vst [vmem:[#allocation5] sm:$0xff] %v268
    %271 = vst [vmem:[#allocation5 + $0x8] sm:$0xff] %v269
    // Predicated region
    $region14: #{tpu_custom_call.1} parent=1 // pred_check
      _
    $region15: #{tpu_custom_call.1} parent=1 // pred_check_branch
      %273 = sbr.rel (0) target = $region17
    $region16: #{tpu_custom_call.1} parent=1 // pred_region
      %275 = vsyncadd [#allocation4], 0
      %s276 = sshll.u32 [#allocation5], 4
      %s277 = int_to_ptr.vmem [resolvable:$true] %s276
      %s278 = sshll.u32 %s2, 4
      %s279 = int_to_ptr.hbm [resolvable:$true] %s278
      %284 = dma.vmem_to_hbm [thread:$0]  %s277, 256, %s279, [#allocation4], 128, 128, 8
    $region17: #{tpu_custom_call.1} parent=1 // pred_fallthru
      _
    // Predicated region
    $region18: #{tpu_custom_call.1} parent=1 // pred_check
      _
    $region19: #{tpu_custom_call.1} parent=1 // pred_check_branch
      %286 = sbr.rel (0) target = $region21
    $region20: #{tpu_custom_call.1} parent=1 // pred_region
      %288 = dma.done [#allocation4], 256
    $region21: #{tpu_custom_call.1} parent=1 // pred_fallthru
      _
    %289 = vsyncpa [#allocation3], 1
    %290 = vsyncpa [#allocation4], 1

</llo_original>
